<compile_context>
chip_gen: v5e
topology: v5e:2x2
jax: 0.10.0
libtpu: 0.0.40
codegen_flags: <defaults>
</compile_context>

<pallas_src>
import functools

import jax
import jax.numpy as jnp
import numpy as np
from jax.experimental import pallas as pl
from jax.experimental.pallas import tpu as pltpu


def _round_up(v, m):
    return ((v + m - 1) // m) * m


# ----------------------------------------------------------------------------
# Pallas kernel: one (token block s, sample b, K block k) step of the fused GEMM
# ----------------------------------------------------------------------------
def _tubes_gemm_kernel(tube_ref, prow_ref, lpb_ref, nkb_ref, wkb_ref,  # SMEM scalar prefetch
                       p_ref,     # (1, tile_L, KB)  compute dtype (bf16) patches
                       w_ref,     # (1, KB, Hp)      compute dtype (bf16) weight K-block
                       b_ref,     # (1, 1, Hp)       f32 bias (per tube)
                       o_ref,     # (1, tile_L, Hp)  out dtype
                       acc_ref):  # (tile_L, Hp)     f32 accumulator scratch
    del tube_ref, prow_ref, lpb_ref, wkb_ref  # only consumed by the index_maps
    s = pl.program_id(0)
    k = pl.program_id(2)

    @pl.when(k == 0)
    def _():
        acc_ref[...] = jnp.zeros_like(acc_ref)

    # Skip K-blocks beyond this tube's own K extent (indices are clamped in the
    # index_maps, so skipped steps also issue no new DMA).
    @pl.when(k < nkb_ref[s])
    def _():
        acc_ref[...] += jnp.dot(p_ref[0], w_ref[0],
                                preferred_element_type=jnp.float32)

    @pl.when(k == pl.num_programs(2) - 1)
    def _():
        o_ref[0] = (acc_ref[...] + b_ref[0]).astype(o_ref.dtype)


def _vmem_limit_bytes(tile_l, kb, hp, compute_dtype, out_dtype):
    cd = jnp.dtype(compute_dtype).itemsize
    od = jnp.dtype(out_dtype).itemsize
    need = (2 * tile_l * kb * cd      # patch tile   (double buffered)
            + 2 * kb * hp * cd        # weight tile  (double buffered)
            + 2 * hp * 4              # bias tile    (double buffered)
            + 2 * tile_l * hp * od    # output tile  (double buffered)
            + tile_l * hp * 4)        # f32 accumulator scratch (single)
    budget = int(need * 1.5) + (8 << 20)      # headroom for Mosaic-internal scratch
    try:
        phys = int(getattr(pltpu.get_tpu_info(), "vmem_capacity_bytes", 128 << 20))
    except Exception:
        phys = 64 << 20
    cap = phys - (8 << 20)                    # never request all of physical VMEM
    return int(max(min(budget, cap), 16 << 20))


# ----------------------------------------------------------------------------
# Glue: im2col and trilinear weight interpolation (PyTorch align_corners=False)
# ----------------------------------------------------------------------------
def _im2col_3d(x, ksize, stride):
    """x: (n, c, T, H, W) -> patches (n, L, c*kt*kh*kw), L = ot*oh*ow."""
    n, c, T, H, W = x.shape
    kt, kh, kw = ksize
    st, sh, sw = stride
    ot = (T - kt) // st + 1
    oh = (H - kh) // sh + 1
    ow = (W - kw) // sw + 1

    t_idx = (jnp.arange(ot) * st)[:, None] + jnp.arange(kt)[None, :]
    h_idx = (jnp.arange(oh) * sh)[:, None] + jnp.arange(kh)[None, :]
    w_idx = (jnp.arange(ow) * sw)[:, None] + jnp.arange(kw)[None, :]

    p = x[:, :, t_idx]                       # (n, c, ot, kt, H, W)
    p = p[:, :, :, :, h_idx]                 # (n, c, ot, kt, oh, kh, W)
    p = p[:, :, :, :, :, :, w_idx]           # (n, c, ot, kt, oh, kh, ow, kw)
    p = p.transpose(0, 2, 4, 6, 1, 3, 5, 7)  # (n, ot, oh, ow, c, kt, kh, kw)
    return p.reshape(n, ot * oh * ow, c * kt * kh * kw)


def _linear_interp_axis(x, out_size, axis):
    in_size = x.shape[axis]
    if out_size == in_size:
        return x
    scale = in_size / out_size
    src = (jnp.arange(out_size, dtype=jnp.float32) + 0.5) * scale - 0.5
    src = jnp.clip(src, 0.0, in_size - 1)
    lo = jnp.floor(src).astype(jnp.int32)
    hi = jnp.minimum(lo + 1, in_size - 1)
    frac = src - lo.astype(jnp.float32)
    x_lo = jnp.take(x, lo, axis=axis)
    x_hi = jnp.take(x, hi, axis=axis)
    bshape = [1] * x.ndim
    bshape[axis] = out_size
    frac = frac.reshape(bshape)
    return x_lo * (1.0 - frac) + x_hi * frac


def _trilinear_interp(weight, out_ksize):
    # weight: (hidden, 3, kt0, kh0, kw0) -> (hidden, 3, *out_ksize)
    w = weight
    for ax, sz in zip((2, 3, 4), out_ksize):
        w = _linear_interp_axis(w, sz, ax)
    return w


# ----------------------------------------------------------------------------
# Module-equivalent forward (all tubes fused into one pallas_call)
# ----------------------------------------------------------------------------
def sparse_tubes_tokenizer(x, conv_proj_weight, conv_proj_bias,
                           kernel_sizes, strides, offsets, hidden_dim,
                           *, compute_dtype=jnp.bfloat16, out_dtype=jnp.float32,
                           max_tile_tokens=512, max_k_block=1024):
    n = x.shape[0]
    num_tubes = len(kernel_sizes)
    H = hidden_dim
    Hp = _round_up(H, 128)   # lane-dense weight columns / output stores

    # --- per-tube im2col + flattened weights (XLA side) ---------------------
    # TODO(synk): fuse this gather into the kernel (x in HBM via pl.ANY + manual
    # window DMA) so the expanded patch tensor is never materialized in HBM.
    patch_list, w_list, Ls, Ks = [], [], [], []
    for i in range(num_tubes):
        weight = (conv_proj_weight if i == 0
                  else _trilinear_interp(conv_proj_weight, kernel_sizes[i]))
        ot, oh, ow = offsets[i]
        x_sl = x[:, :, ot:, oh:, ow:]
        patches = _im2col_3d(x_sl, kernel_sizes[i], strides[i])   # (n, L_i, K_i)
        patch_list.append(patches)
        w_list.append(weight.reshape(hidden_dim, -1).T)           # (K_i, H)
        Ls.append(patches.shape[1])
        Ks.append(patches.shape[2])

    # --- per-tube K blocking (no padding to the global max K) ---------------
    # KB: large enough that the smallest tube needs exactly one K-block,
    # capped so the biggest tube keeps a small K-block count (step overhead).
    KB = max(128, min(max_k_block, min(_round_up(K, 128) for K in Ks)))
    Kps = [_round_up(K, KB) for K in Ks]
    nkbs = [Kp // KB for Kp in Kps]
    max_nkb = max(nkbs)

    # --- per-tube L tiling (each tube pads its own remainder) ----------------
    tile_L = min(max_tile_tokens, _round_up(max(Ls), 8))
    Lps = [_round_up(L, tile_L) for L in Ls]
    Lp_total = sum(Lps)

    # --- build fused operands -----------------------------------------------
    # Patches: per tube, reshape (n, Lp, nkb, KB) -> (n, nkb, Lp, KB) so every
    # (token block, k block) is a contiguous (tile_L, KB) slab; concat tubes
    # along the row axis in final output order.
    p_parts, w_parts = [], []
    for p, w, K, Kp, L, Lp in zip(patch_list, w_list, Ks, Kps, Ls, Lps):
        nkb = Kp // KB
        p = jnp.pad(p, ((0, 0), (0, Lp - L), (0, Kp - K)))
        p = p.reshape(n, Lp, nkb, KB).transpose(0, 2, 1, 3).reshape(n, nkb * Lp, KB)
        p_parts.append(p.astype(compute_dtype))
        w = jnp.pad(w, ((0, Kp - K), (0, Hp - H))).reshape(nkb, KB, Hp)
        w_parts.append(w)
    p_all = jnp.concatenate(p_parts, axis=1)                         # (n, R, KB)
    w_all = jnp.concatenate(w_parts, axis=0).astype(compute_dtype)   # (sum nkb, KB, Hp)
    b_all = jnp.pad(conv_proj_bias.astype(jnp.float32),
                    ((0, 0), (0, Hp - H)))[:, None, :]               # (T, 1, Hp)

    # --- scalar-prefetch metadata per token block ----------------------------
    tube_l, prow_l, lpb_l, nkb_l, wkb_l = [], [], [], [], []
    row_blk_off = 0   # offset into p_all's row axis, in units of tile_L blocks
    wkb_off = 0       # offset into w_all's K-block axis
    for i in range(num_tubes):
        nlb = Lps[i] // tile_L
        for lb in range(nlb):
            tube_l.append(i)
            prow_l.append(row_blk_off + lb)   # row block at k == 0
            lpb_l.append(nlb)                 # row-block stride per k increment
            nkb_l.append(nkbs[i])
            wkb_l.append(wkb_off)
        row_blk_off += nkbs[i] * nlb
        wkb_off += nkbs[i]
    num_blocks = len(tube_l)

    to_i32 = lambda v: jnp.asarray(np.asarray(v, np.int32))
    tube_of_block, prow_base, lpb_arr, nkb_arr, wkb_base = map(
        to_i32, (tube_l, prow_l, lpb_l, nkb_l, wkb_l))

    # --- index maps (grid = (token_block s, sample b, k_block k)) ------------
    def _p_map(s, b, k, tube, prow, lpb, nkb, wkb):
        kk = jnp.minimum(k, nkb[s] - 1)       # clamp: skipped k issues no new DMA
        return (b, prow[s] + kk * lpb[s], 0)

    def _w_map(s, b, k, tube, prow, lpb, nkb, wkb):
        return (wkb[s] + jnp.minimum(k, nkb[s] - 1), 0, 0)

    def _b_map(s, b, k, tube, prow, lpb, nkb, wkb):
        return (tube[s], 0, 0)

    def _o_map(s, b, k, tube, prow, lpb, nkb, wkb):
        return (b, s, 0)

    # --- cost estimate / VMEM budget ------------------------------------------
    cd = jnp.dtype(compute_dtype).itemsize
    od = jnp.dtype(out_dtype).itemsize
    flops = 2 * n * sum(Lp * Kp for Lp, Kp in zip(Lps, Kps)) * Hp
    bytes_accessed = int(
        p_all.size * cd
        + n * sum((Lps[i] // tile_L) * Kps[i] for i in range(num_tubes)) * Hp * cd
        + n * Lp_total * Hp * od
        + b_all.size * 4)

    out_padded = pl.pallas_call(
        _tubes_gemm_kernel,
        out_shape=jax.ShapeDtypeStruct((n, Lp_total, Hp), out_dtype),
        grid_spec=pltpu.PrefetchScalarGridSpec(
            num_scalar_prefetch=5,
            grid=(num_blocks, n, max_nkb),
            in_specs=[
                pl.BlockSpec((1, tile_L, KB), _p_map),
                pl.BlockSpec((1, KB, Hp), _w_map),
                pl.BlockSpec((1, 1, Hp), _b_map),
            ],
            out_specs=pl.BlockSpec((1, tile_L, Hp), _o_map),
            scratch_shapes=[pltpu.VMEM((tile_L, Hp), jnp.float32)],
        ),
        compiler_params=pltpu.CompilerParams(
            dimension_semantics=("parallel", "parallel", "arbitrary"),
            vmem_limit_bytes=_vmem_limit_bytes(tile_L, KB, Hp,
                                               compute_dtype, out_dtype),
        ),
        cost_estimate=pl.CostEstimate(flops=int(flops), transcendentals=0,
                                      bytes_accessed=bytes_accessed),
    )(tube_of_block, prow_base, lpb_arr, nkb_arr, wkb_base, p_all, w_all, b_all)

    # --- strip per-tube L padding and hidden padding (no-op for aligned configs)
    if Hp != H:
        out_padded = out_padded[:, :, :H]
    if any(Lp != L for Lp, L in zip(Lps, Ls)):
        parts, off = [], 0
        for L, Lp in zip(Ls, Lps):
            parts.append(out_padded[:, off:off + L, :])
            off += Lp
        out_padded = parts[0] if len(parts) == 1 else jnp.concatenate(parts, axis=1)
    return out_padded                                           # (n, total_L, H)


# ----------------------------------------------------------------------------
# Pure-JAX reference (lax conv3d, same bf16-operand / f32-accumulate regime)
# ----------------------------------------------------------------------------
def _reference(x, conv_proj_weight, conv_proj_bias,
               kernel_sizes, strides, offsets, hidden_dim,
               compute_dtype=jnp.bfloat16):
    n = x.shape[0]
    tubes = []
    for i in range(len(kernel_sizes)):
        weight = (conv_proj_weight if i == 0
                  else _trilinear_interp(conv_proj_weight, kernel_sizes[i]))
        ot, oh, ow = offsets[i]
        x_sl = x[:, :, ot:, oh:, ow:]
        out = jax.lax.conv_general_dilated(
            x_sl.astype(compute_dtype), weight.astype(compute_dtype),
            window_strides=strides[i], padding="VALID",
            dimension_numbers=("NCDHW", "OIDHW", "NCDHW"),
            preferred_element_type=jnp.float32)
        out = out + conv_proj_bias[i].astype(jnp.float32)[None, :, None, None, None]
        tubes.append(out.reshape(n, hidden_dim, -1))
    out = jnp.concatenate(tubes, axis=-1)
    return jnp.transpose(out, (0, 2, 1))


if __name__ == "__main__":
    hidden_dim = 32
    # Tube 1 is deliberately larger than tube 0 so the per-tube K (256 vs 768
    # padded) and per-tube L (27 vs 8) differ: this exercises the K-block
    # accumulation, the K-block skip path and the per-tube L padding/compaction.
    kernel_sizes = ((4, 4, 4), (4, 8, 8))
    strides = ((4, 8, 8), (4, 8, 8))
    offsets = ((0, 0, 0), (2, 2, 2))

    key = jax.random.PRNGKey(0)
    kx, kw_, kb = jax.random.split(key, 3)

    # input video: (n, c=3, t, h, w)
    x = jax.random.normal(kx, (2, 3, 12, 24, 24), dtype=jnp.float32)

    conv_proj_weight = jax.random.normal(
        kw_, (hidden_dim, 3) + kernel_sizes[0], dtype=jnp.float32)
    conv_proj_bias = 0.1 * jax.random.normal(
        kb, (len(kernel_sizes), hidden_dim), dtype=jnp.float32)

    fwd = jax.jit(functools.partial(
        sparse_tubes_tokenizer,
        kernel_sizes=kernel_sizes, strides=strides,
        offsets=offsets, hidden_dim=hidden_dim))

    out = jax.block_until_ready(fwd(x, conv_proj_weight, conv_proj_bias))
    ref = jax.block_until_ready(
        _reference(x, conv_proj_weight, conv_proj_bias,
                   kernel_sizes, strides, offsets, hidden_dim))

    assert out.shape == ref.shape, (out.shape, ref.shape)
    np.testing.assert_allclose(np.asarray(out), np.asarray(ref),
                               rtol=2e-2, atol=2e-2)
    print("KERNEL_OK")
</pallas_src>

<mosaic_0001>
module attributes {stable_mosaic.version = 11 : i64} {
  func.func @_tubes_gemm_kernel(%arg0: i32, %arg1: i32, %arg2: i32, %arg3: memref<2xi32, #tpu.memory_space<smem>>, %arg4: memref<2xi32, #tpu.memory_space<smem>>, %arg5: memref<2xi32, #tpu.memory_space<smem>>, %arg6: memref<2xi32, #tpu.memory_space<smem>>, %arg7: memref<2xi32, #tpu.memory_space<smem>>, %arg8: memref<1x32x256xbf16, #tpu.memory_space<vmem>>, %arg9: memref<1x256x128xbf16, #tpu.memory_space<vmem>>, %arg10: memref<1x1x128xf32, #tpu.memory_space<vmem>>, %arg11: memref<1x32x128xf32, #tpu.memory_space<vmem>>, %arg12: memref<32x128xf32, #tpu.memory_space<vmem>>) attributes {dimension_semantics = [#tpu.dimension_semantics<parallel>, #tpu.dimension_semantics<parallel>, #tpu.dimension_semantics<arbitrary>], iteration_bounds = array<i64: 2, 2, 3>, scalar_prefetch = 5 : i64, scratch_operands = 1 : i64, tpu.core_type = #tpu.core_type<tc>, window_params = [{transform_indices = @transform_0, window_bounds = array<i64: 1, 32, 256>}, {transform_indices = @transform_1, window_bounds = array<i64: 1, 256, 128>}, {transform_indices = @transform_2, window_bounds = array<i64: 1, 1, 128>}, {transform_indices = @transform_3, window_bounds = array<i64: 1, 32, 128>}]} {
    %c0_i32 = arith.constant 0 : i32
    %0 = arith.cmpi eq, %arg2, %c0_i32 : i32
    %1 = arith.extui %0 : i1 to i32
    %c0_i32_0 = arith.constant 0 : i32
    %2 = arith.cmpi ne, %1, %c0_i32_0 : i32
    scf.if %2 {
      %cst = arith.constant 0.000000e+00 : f32
      %11 = vector.broadcast %cst : f32 to vector<32x128xf32>
      %c0 = arith.constant 0 : index
      %c0_3 = arith.constant 0 : index
      %12 = vector.load %arg12[%c0, %c0_3] : memref<32x128xf32, #tpu.memory_space<vmem>>, vector<32x128xf32>
      tpu.vector_store %arg12[%c0, %c0_3], %11 {strides = array<i32>} : memref<32x128xf32, #tpu.memory_space<vmem>>, vector<32x128xf32>,
    } else {
    }
    %3 = arith.index_cast %arg0 : i32 to index
    %4 = memref.load %arg6[%3] : memref<2xi32, #tpu.memory_space<smem>>
    %5 = arith.cmpi slt, %arg2, %4 : i32
    %6 = arith.extui %5 : i1 to i32
    %c0_i32_1 = arith.constant 0 : i32
    %7 = arith.cmpi ne, %6, %c0_i32_1 : i32
    scf.if %7 {
      %c0 = arith.constant 0 : index
      %c0_3 = arith.constant 0 : index
      %11 = vector.load %arg12[%c0, %c0_3] : memref<32x128xf32, #tpu.memory_space<vmem>>, vector<32x128xf32>
      %c0_4 = arith.constant 0 : index
      %c0_5 = arith.constant 0 : index
      %c0_6 = arith.constant 0 : index
      %12 = vector.load %arg8[%c0_4, %c0_5, %c0_6] : memref<1x32x256xbf16, #tpu.memory_space<vmem>>, vector<1x32x256xbf16>
      %13 = vector.shape_cast %12 : vector<1x32x256xbf16> to vector<32x256xbf16>
      %c0_7 = arith.constant 0 : index
      %c0_8 = arith.constant 0 : index
      %c0_9 = arith.constant 0 : index
      %14 = vector.load %arg9[%c0_7, %c0_8, %c0_9] : memref<1x256x128xbf16, #tpu.memory_space<vmem>>, vector<1x256x128xbf16>
      %15 = vector.shape_cast %14 : vector<1x256x128xbf16> to vector<256x128xbf16>
      %cst = arith.constant dense<0.000000e+00> : vector<32x128xf32>
      %16 = tpu.matmul %13, %15, %cst {dimension_numbers = #tpu.dot_dimension_numbers<[1], [0], [0], [1], [0, 0, 1, 1], [], []>} : vector<32x256xbf16>, vector<256x128xbf16>, vector<32x128xf32> -> vector<32x128xf32>
      %17 = arith.addf %11, %16 : vector<32x128xf32>
      %c0_10 = arith.constant 0 : index
      %c0_11 = arith.constant 0 : index
      %18 = vector.load %arg12[%c0_10, %c0_11] : memref<32x128xf32, #tpu.memory_space<vmem>>, vector<32x128xf32>
      tpu.vector_store %arg12[%c0_10, %c0_11], %17 {strides = array<i32>} : memref<32x128xf32, #tpu.memory_space<vmem>>, vector<32x128xf32>,
    } else {
    }
    %c2_i32 = arith.constant 2 : i32
    %8 = arith.cmpi eq, %arg2, %c2_i32 : i32
    %9 = arith.extui %8 : i1 to i32
    %c0_i32_2 = arith.constant 0 : i32
    %10 = arith.cmpi ne, %9, %c0_i32_2 : i32
    scf.if %10 {
      %c0 = arith.constant 0 : index
      %c0_3 = arith.constant 0 : index
      %11 = vector.load %arg12[%c0, %c0_3] : memref<32x128xf32, #tpu.memory_space<vmem>>, vector<32x128xf32>
      %c0_4 = arith.constant 0 : index
      %c0_5 = arith.constant 0 : index
      %c0_6 = arith.constant 0 : index
      %12 = vector.load %arg10[%c0_4, %c0_5, %c0_6] : memref<1x1x128xf32, #tpu.memory_space<vmem>>, vector<1x1x128xf32>
      %13 = vector.shape_cast %12 : vector<1x1x128xf32> to vector<1x128xf32>
      %14 = vector.broadcast %13 : vector<1x128xf32> to vector<32x128xf32>
      %15 = arith.addf %11, %14 : vector<32x128xf32>
      %c0_7 = arith.constant 0 : index
      %c0_8 = arith.constant 0 : index
      %c0_9 = arith.constant 0 : index
      %16 = vector.load %arg11[%c0_7, %c0_8, %c0_9] : memref<1x32x128xf32, #tpu.memory_space<vmem>>, vector<1x32x128xf32>
      %17 = vector.shape_cast %16 : vector<1x32x128xf32> to vector<32x128xf32>
      %18 = vector.shape_cast %15 : vector<32x128xf32> to vector<1x32x128xf32>
      tpu.vector_store %arg11[%c0_7, %c0_8, %c0_9], %18 {strides = array<i32>} : memref<1x32x128xf32, #tpu.memory_space<vmem>>, vector<1x32x128xf32>,
    } else {
    }
    return
  }
  func.func @transform_0(%arg0: i32, %arg1: i32, %arg2: i32, %arg3: memref<2xi32, #tpu.memory_space<smem>>, %arg4: memref<2xi32, #tpu.memory_space<smem>>, %arg5: memref<2xi32, #tpu.memory_space<smem>>, %arg6: memref<2xi32, #tpu.memory_space<smem>>, %arg7: memref<2xi32, #tpu.memory_space<smem>>) -> (i32, i32, i32) {
    %0 = arith.index_cast %arg0 : i32 to index
    %1 = memref.load %arg6[%0] : memref<2xi32, #tpu.memory_space<smem>>
    %c1_i32 = arith.constant 1 : i32
    %2 = arith.subi %1, %c1_i32 : i32
    %3 = arith.minsi %arg2, %2 : i32
    %4 = arith.index_cast %arg0 : i32 to index
    %5 = memref.load %arg4[%4] : memref<2xi32, #tpu.memory_space<smem>>
    %6 = arith.index_cast %arg0 : i32 to index
    %7 = memref.load %arg5[%6] : memref<2xi32, #tpu.memory_space<smem>>
    %8 = arith.muli %3, %7 : i32
    %9 = arith.addi %5, %8 : i32
    %c0_i32 = arith.constant 0 : i32
    %c0_i32_0 = arith.constant 0 : i32
    return %arg1, %9, %c0_i32 : i32, i32, i32
  }
  func.func @transform_1(%arg0: i32, %arg1: i32, %arg2: i32, %arg3: memref<2xi32, #tpu.memory_space<smem>>, %arg4: memref<2xi32, #tpu.memory_space<smem>>, %arg5: memref<2xi32, #tpu.memory_space<smem>>, %arg6: memref<2xi32, #tpu.memory_space<smem>>, %arg7: memref<2xi32, #tpu.memory_space<smem>>) -> (i32, i32, i32) {
    %0 = arith.index_cast %arg0 : i32 to index
    %1 = memref.load %arg7[%0] : memref<2xi32, #tpu.memory_space<smem>>
    %2 = arith.index_cast %arg0 : i32 to index
    %3 = memref.load %arg6[%2] : memref<2xi32, #tpu.memory_space<smem>>
    %c1_i32 = arith.constant 1 : i32
    %4 = arith.subi %3, %c1_i32 : i32
    %5 = arith.minsi %arg2, %4 : i32
    %6 = arith.addi %1, %5 : i32
    %c0_i32 = arith.constant 0 : i32
    %c0_i32_0 = arith.constant 0 : i32
    %c0_i32_1 = arith.constant 0 : i32
    return %6, %c0_i32, %c0_i32_0 : i32, i32, i32
  }
  func.func @transform_2(%arg0: i32, %arg1: i32, %arg2: i32, %arg3: memref<2xi32, #tpu.memory_space<smem>>, %arg4: memref<2xi32, #tpu.memory_space<smem>>, %arg5: memref<2xi32, #tpu.memory_space<smem>>, %arg6: memref<2xi32, #tpu.memory_space<smem>>, %arg7: memref<2xi32, #tpu.memory_space<smem>>) -> (i32, i32, i32) {
    %0 = arith.index_cast %arg0 : i32 to index
    %1 = memref.load %arg3[%0] : memref<2xi32, #tpu.memory_space<smem>>
    %c0_i32 = arith.constant 0 : i32
    %c0_i32_0 = arith.constant 0 : i32
    %c0_i32_1 = arith.constant 0 : i32
    return %1, %c0_i32, %c0_i32_0 : i32, i32, i32
  }
  func.func @transform_3(%arg0: i32, %arg1: i32, %arg2: i32, %arg3: memref<2xi32, #tpu.memory_space<smem>>, %arg4: memref<2xi32, #tpu.memory_space<smem>>, %arg5: memref<2xi32, #tpu.memory_space<smem>>, %arg6: memref<2xi32, #tpu.memory_space<smem>>, %arg7: memref<2xi32, #tpu.memory_space<smem>>) -> (i32, i32, i32) {
    %c0_i32 = arith.constant 0 : i32
    %c0_i32_0 = arith.constant 0 : i32
    return %arg1, %arg0, %c0_i32 : i32, i32, i32
  }
}

</mosaic_0001>

<llo_original>
// kernel: sparse_tubes_tokenizer.1
$region0: #{sparse_tubes_tokenizer.1}
  #allocation0 [shape = 'u32[]', space=smem, size = 0x4, offset = 0x4, fixed_abs, tag = 'smem constant byte address 0x4 - core index']
  #allocation1 [shape = 'u32[72,128]{1,0:T(1,128)}', space=vmem, size = 0x9000, scoped, tag = 'internal scratch']
  #allocation2 [shape = 'f32[32,128]{1,0:T(8,128)}', space=vmem, size = 0x4000, scoped, tag = 'scratch operand']
  #allocation3 [shape = 's32[1]{0}', space=sflag, size = 0x4, scoped, tag = 'scoped memory for sparse_tubes_tokenizer.1']
  #allocation4 [shape = 'u8[512]{0}', space=smem, size = 0x200, scoped, tag = 'prefetched SMEM operand 0']
  #allocation5 [shape = 'u8[512]{0}', space=smem, size = 0x200, scoped, tag = 'prefetched SMEM operand 1']
  #allocation6 [shape = 'u8[512]{0}', space=smem, size = 0x200, scoped, tag = 'prefetched SMEM operand 2']
  #allocation7 [shape = 'u8[512]{0}', space=smem, size = 0x200, scoped, tag = 'prefetched SMEM operand 3']
  #allocation8 [shape = 'u8[512]{0}', space=smem, size = 0x200, scoped, tag = 'prefetched SMEM operand 4']
  %s0 = inlined_call_operand.vmem [shape: s32[2], index: 0, kind: input, shape index: {}, may-alias: {0,1,4}]
  %s1 = inlined_call_operand.vmem [shape: s32[2], index: 1, kind: input, shape index: {}, may-alias: {0,1,4}]
  %s2 = inlined_call_operand.vmem [shape: s32[2], index: 2, kind: input, shape index: {}]
  %s3 = inlined_call_operand.vmem [shape: s32[2], index: 3, kind: input, shape index: {}]
  %s4 = inlined_call_operand.vmem [shape: s32[2], index: 4, kind: input, shape index: {}, may-alias: {0,1,4}]
  %s5 = inlined_call_operand.vmem [shape: bf16[2,128,256], index: 5, kind: input, shape index: {}]
  %s6 = inlined_call_operand.vmem [shape: bf16[4,256,128], index: 6, kind: input, shape index: {}]
  %s7 = inlined_call_operand.vmem [shape: f32[2,1,128], index: 7, kind: input, shape index: {}]
  %s8 = inlined_call_operand.vmem [shape: f32[2,64,128], index: 8, kind: output, shape index: {}]
  %s9 = sld [smem:[#allocation0]]
  $region57: #{sparse_tubes_tokenizer.1} parent=0
    _
  %s11 = ssub.s32 1, %s9
  %s12 = scalar_select 0, %s11, %s9
  %s14 = sshll.u32 %s0, 4
  %s15 = int_to_ptr.vmem [resolvable:$true] %s14
  %17 = dma.vmem_to_smem %s15, 16, [#allocation4], [#allocation3]
  %s19 = sshll.u32 %s1, 4
  %s20 = int_to_ptr.vmem [resolvable:$true] %s19
  %22 = dma.vmem_to_smem %s20, 16, [#allocation5], [#allocation3]
  %s24 = sshll.u32 %s2, 4
  %s25 = int_to_ptr.vmem [resolvable:$true] %s24
  %27 = dma.vmem_to_smem %s25, 16, [#allocation6], [#allocation3]
  %s29 = sshll.u32 %s3, 4
  %s30 = int_to_ptr.vmem [resolvable:$true] %s29
  %32 = dma.vmem_to_smem %s30, 16, [#allocation7], [#allocation3]
  %s34 = sshll.u32 %s4, 4
  %s35 = int_to_ptr.vmem [resolvable:$true] %s34
  %37 = dma.vmem_to_smem %s35, 16, [#allocation8], [#allocation3]
  %39 = dma.done [#allocation3], 80
  %40 = sfence
  loop: start=0, step=1, limit=14
  $region2: #{sparse_tubes_tokenizer.1} parent=0 // loop_pre_header
    _
  $region3: #{sparse_tubes_tokenizer.1} parent=0 // loop_header
    %s42 = sphi 0, %s46
    %p43 = scmp.ge.s32.totalorder %s42, 14
    %s49 = sphi 0, %s68
    %s50 = sphi 0, %s64
    %s51 = sphi 0, %s60
    %s52 = sphi 0, %s49
    %s53 = sphi 0, %s50
    %s54 = sphi 0, %s51
    %s55 = sphi 0, %s52
    %s56 = sphi 0, %s53
    %s57 = sphi 0, %s54
    %s89 = sphi 0, %s91
    %s92 = sphi 0, %s89
    %s93 = sphi 0, %s92
    %s109 = sphi 0, %s93
    %s127 = sphi 0, %s129
    %s130 = sphi 0, %s127
    %s131 = sphi 0, %s130
    %s147 = sphi 0, %s131
    %s155 = sphi 0, %s157
    %s158 = sphi 0, %s155
    %s159 = sphi 0, %s158
    %s175 = sphi 0, %s159
    %s183 = sphi 0, %s185
    %s186 = sphi 0, %s183
    %s187 = sphi 0, %s186
    %s203 = sphi 0, %s187
  $region4: #{sparse_tubes_tokenizer.1} parent=0 // loop_header_branch
    %45 = sbr.rel (%p43) target = $region8
  $region5: #{sparse_tubes_tokenizer.1} parent=0 // loop_body
    %s47 = ssub.s32 %s42, 1
    %s48 = ssub.s32 %s42, 2
    %s58 = sadd.s32 1, %s51
    %p59 = scmp.ge.s32.totalorder %s58, 3
    %s60 = scalar_select %p59, 0, %s58
    %s61 = sadd.s32 1, %s50
    %s62 = scalar_select %p59, %s61, %s50
    %p63 = scmp.ge.s32.totalorder %s62, 2
    %s64 = scalar_select %p63, 0, %s62
    %s65 = sadd.s32 1, %s49
    %s66 = scalar_select %p63, %s65, %s49
    %p67 = scmp.ge.s32.totalorder %s66, 2
    %s68 = scalar_select %p67, 0, %s66
    %s69 = sld [smem:[#allocation7 + %s49]]
    %s70 = ssub.s32 %s69, 1
    %p71 = scmp.lt.s32.totalorder %s51, %s70
    %s72 = scalar_select %p71, %s51, %s70
    %s73 = sld [smem:[#allocation5 + %s49]]
    %s74 = sld [smem:[#allocation6 + %s49]]
    %s75 = smul.u32 %s72, %s74
    %s76 = sadd.s32 %s73, %s75
    %s77 = sld [smem:[#allocation7 + %s68]]
    %s78 = ssub.s32 %s77, 1
    %p79 = scmp.lt.s32.totalorder %s60, %s78
    %s80 = scalar_select %p79, %s60, %s78
    %s81 = sld [smem:[#allocation5 + %s68]]
    %s82 = sld [smem:[#allocation6 + %s68]]
    %s83 = smul.u32 %s80, %s82
    %s84 = sadd.s32 %s81, %s83
    %s85 = ssub.s32 %s50, %s64
    %s86 = ssub.s32 %s76, %s84
    %s87 = sor.u32 %s85, %s86
    %p88 = scmp.eq.s32.totalorder %s87, 0
    %s90 = sadd.s32 %s89, 1
    %s91 = scalar_select %p88, %s89, %s90
    %p94 = pneg %p88
    %p95 = scmp.eq.s32.totalorder %s42, 11
    %p96 = por %p94, %p95
    %p97 = scmp.ne.s32.totalorder %s89, %s92
    %p98 = scmp.eq.s32.totalorder %s42, 0
    %p99 = por %p97, %p98
    %p100 = scmp.ne.s32.totalorder %s89, %s92
    %p101 = scmp.eq.s32.totalorder %s47, 11
    %p102 = por %p100, %p101
    %p103 = scmp.ne.s32.totalorder %s92, %s93
    %p104 = scmp.eq.s32.totalorder %s47, 0
    %p105 = por %p103, %p104
    %p106 = scmp.ne.s32.totalorder %s92, %s93
    %p107 = scmp.eq.s32.totalorder %s48, 11
    %p108 = por %p106, %p107
    %p110 = scmp.ne.s32.totalorder %s93, %s109
    %p111 = scmp.eq.s32.totalorder %s48, 0
    %p112 = por %p110, %p111
    %s113 = sld [smem:[#allocation8 + %s49]]
    %s114 = sld [smem:[#allocation7 + %s49]]
    %s115 = ssub.s32 %s114, 1
    %p116 = scmp.lt.s32.totalorder %s51, %s115
    %s117 = scalar_select %p116, %s51, %s115
    %s118 = sadd.s32 %s113, %s117
    %s119 = sld [smem:[#allocation8 + %s68]]
    %s120 = sld [smem:[#allocation7 + %s68]]
    %s121 = ssub.s32 %s120, 1
    %p122 = scmp.lt.s32.totalorder %s60, %s121
    %s123 = scalar_select %p122, %s60, %s121
    %s124 = sadd.s32 %s119, %s123
    %s125 = ssub.s32 %s118, %s124
    %p126 = scmp.eq.s32.totalorder %s125, 0
    %s128 = sadd.s32 %s127, 1
    %s129 = scalar_select %p126, %s127, %s128
    %p132 = pneg %p126
    %p133 = scmp.eq.s32.totalorder %s42, 11
    %p134 = por %p132, %p133
    %p135 = scmp.ne.s32.totalorder %s127, %s130
    %p136 = scmp.eq.s32.totalorder %s42, 0
    %p137 = por %p135, %p136
    %p138 = scmp.ne.s32.totalorder %s127, %s130
    %p139 = scmp.eq.s32.totalorder %s47, 11
    %p140 = por %p138, %p139
    %p141 = scmp.ne.s32.totalorder %s130, %s131
    %p142 = scmp.eq.s32.totalorder %s47, 0
    %p143 = por %p141, %p142
    %p144 = scmp.ne.s32.totalorder %s130, %s131
    %p145 = scmp.eq.s32.totalorder %s48, 11
    %p146 = por %p144, %p145
    %p148 = scmp.ne.s32.totalorder %s131, %s147
    %p149 = scmp.eq.s32.totalorder %s48, 0
    %p150 = por %p148, %p149
    %s151 = sld [smem:[#allocation4 + %s49]]
    %s152 = sld [smem:[#allocation4 + %s68]]
    %s153 = ssub.s32 %s151, %s152
    %p154 = scmp.eq.s32.totalorder %s153, 0
    %s156 = sadd.s32 %s155, 1
    %s157 = scalar_select %p154, %s155, %s156
    %p160 = pneg %p154
    %p161 = scmp.eq.s32.totalorder %s42, 11
    %p162 = por %p160, %p161
    %p163 = scmp.ne.s32.totalorder %s155, %s158
    %p164 = scmp.eq.s32.totalorder %s42, 0
    %p165 = por %p163, %p164
    %p166 = scmp.ne.s32.totalorder %s155, %s158
    %p167 = scmp.eq.s32.totalorder %s47, 11
    %p168 = por %p166, %p167
    %p169 = scmp.ne.s32.totalorder %s158, %s159
    %p170 = scmp.eq.s32.totalorder %s47, 0
    %p171 = por %p169, %p170
    %p172 = scmp.ne.s32.totalorder %s158, %s159
    %p173 = scmp.eq.s32.totalorder %s48, 11
    %p174 = por %p172, %p173
    %p176 = scmp.ne.s32.totalorder %s159, %s175
    %p177 = scmp.eq.s32.totalorder %s48, 0
    %p178 = por %p176, %p177
    %s179 = ssub.s32 %s50, %s64
    %s180 = ssub.s32 %s49, %s68
    %s181 = sor.u32 %s179, %s180
    %p182 = scmp.eq.s32.totalorder %s181, 0
    %s184 = sadd.s32 %s183, 1
    %s185 = scalar_select %p182, %s183, %s184
    %p188 = pneg %p182
    %p189 = scmp.eq.s32.totalorder %s42, 11
    %p190 = por %p188, %p189
    %p191 = scmp.ne.s32.totalorder %s183, %s186
    %p192 = scmp.eq.s32.totalorder %s42, 0
    %p193 = por %p191, %p192
    %p194 = scmp.ne.s32.totalorder %s183, %s186
    %p195 = scmp.eq.s32.totalorder %s47, 11
    %p196 = por %p194, %p195
    %p197 = scmp.ne.s32.totalorder %s186, %s187
    %p198 = scmp.eq.s32.totalorder %s47, 0
    %p199 = por %p197, %p198
    %p200 = scmp.ne.s32.totalorder %s186, %s187
    %p201 = scmp.eq.s32.totalorder %s48, 11
    %p202 = por %p200, %p201
    %p204 = scmp.ne.s32.totalorder %s187, %s203
    %p205 = scmp.eq.s32.totalorder %s48, 0
    %p206 = por %p204, %p205
    %p207 = scmp.le.s32.totalorder 1, %s42
    %p208 = scmp.lt.s32.totalorder %s42, 13
    %p209 = pnand %p207, %p208
    %p210 = pneg %p209
    // Predicated region
    $region9: #{sparse_tubes_tokenizer.1} parent=5 // pred_check
      _
    $region10: #{sparse_tubes_tokenizer.1} parent=5 // pred_check_branch
      %212 = sbr.rel (%p209) target = $region12
    $region11: #{sparse_tubes_tokenizer.1} parent=5 // pred_region
      %s213 = ssub.s32 %s42, 1
    $region12: #{sparse_tubes_tokenizer.1} parent=5 // pred_fallthru
      _
    %p214 = scmp.lt.s32.totalorder %s42, 12
    // Predicated region
    $region13: #{sparse_tubes_tokenizer.1} parent=5 // pred_check
      %p215 = pneg %p214
    $region14: #{sparse_tubes_tokenizer.1} parent=5 // pred_check_branch
      %217 = sbr.rel (%p215) target = $region16
    $region15: #{sparse_tubes_tokenizer.1} parent=5 // pred_region
      // Predicated region
      $region17: #{sparse_tubes_tokenizer.1} parent=15 // pred_check
        %p218 = pneg %p99
      $region18: #{sparse_tubes_tokenizer.1} parent=15 // pred_check_branch
        %220 = sbr.rel (%p218) target = $region20
      $region19: #{sparse_tubes_tokenizer.1} parent=15 // pred_region
        %s221 = sld [smem:[#allocation7 + %s49]]
        %s222 = ssub.s32 %s221, 1
        %p223 = scmp.lt.s32.totalorder %s51, %s222
        %s224 = scalar_select %p223, %s51, %s222
        %s225 = sld [smem:[#allocation5 + %s49]]
        %s226 = sld [smem:[#allocation6 + %s49]]
        %s227 = smul.u32 %s224, %s226
        %s228 = sadd.s32 %s225, %s227
        %s229 = smul.u32 4, %s228
        %p230 = scmp.lt.s32.totalorder %s50, 1
        %s231 = scalar_select %p230, %s50, 1
        %p232 = scmp.lt.s32.totalorder %s229, 15
        %s233 = scalar_select %p232, %s229, 15
        %s234 = smul.addr %s233, 2
        %s235 = smul.addr %s231, 32
        %s236 = sadd.s32 %s234, %s235
        %s237 = smul.addr %s236, 4
        %s238 = scalar_lea.vmem %s5, %s237
        %s239 = sld [smem:[#allocation7 + %s49]]
        %s240 = ssub.s32 %s239, 1
        %p241 = scmp.lt.s32.totalorder %s51, %s240
        %s242 = scalar_select %p241, %s51, %s240
        %s243 = sld [smem:[#allocation5 + %s49]]
        %s244 = sld [smem:[#allocation6 + %s49]]
        %s245 = smul.u32 %s242, %s244
        %s246 = sadd.s32 %s243, %s245
        %s247 = smul.u32 4, %s246
      $region20: #{sparse_tubes_tokenizer.1} parent=15 // pred_fallthru
        _
      // Predicated region
      $region21: #{sparse_tubes_tokenizer.1} parent=15 // pred_check
        %p248 = pneg %p137
      $region22: #{sparse_tubes_tokenizer.1} parent=15 // pred_check_branch
        %250 = sbr.rel (%p248) target = $region24
      $region23: #{sparse_tubes_tokenizer.1} parent=15 // pred_region
        %s251 = sld [smem:[#allocation8 + %s49]]
        %s252 = sld [smem:[#allocation7 + %s49]]
        %s253 = ssub.s32 %s252, 1
        %p254 = scmp.lt.s32.totalorder %s51, %s253
        %s255 = scalar_select %p254, %s51, %s253
        %s256 = sadd.s32 %s251, %s255
        %p257 = scmp.lt.s32.totalorder %s256, 3
        %s258 = scalar_select %p257, %s256, 3
        %s259 = smul.addr %s258, 32
        %s260 = smul.addr %s259, 4
        %s261 = scalar_lea.vmem %s6, %s260
        %s262 = sld [smem:[#allocation8 + %s49]]
        %s263 = sld [smem:[#allocation7 + %s49]]
        %s264 = ssub.s32 %s263, 1
        %p265 = scmp.lt.s32.totalorder %s51, %s264
        %s266 = scalar_select %p265, %s51, %s264
        %s267 = sadd.s32 %s262, %s266
      $region24: #{sparse_tubes_tokenizer.1} parent=15 // pred_fallthru
        _
      // Predicated region
      $region25: #{sparse_tubes_tokenizer.1} parent=15 // pred_check
        %p268 = pneg %p165
      $region26: #{sparse_tubes_tokenizer.1} parent=15 // pred_check_branch
        %270 = sbr.rel (%p268) target = $region28
      $region27: #{sparse_tubes_tokenizer.1} parent=15 // pred_region
        %s271 = sld [smem:[#allocation4 + %s49]]
        %p272 = scmp.lt.s32.totalorder %s271, 1
        %s273 = scalar_select %p272, %s271, 1
        %s274 = scalar_lea.vmem %s7, %s273
        %s275 = sld [smem:[#allocation4 + %s49]]
      $region28: #{sparse_tubes_tokenizer.1} parent=15 // pred_fallthru
        _
    $region16: #{sparse_tubes_tokenizer.1} parent=5 // pred_fallthru
      _
    %p276 = scmp.le.s32.totalorder 1, %s42
    %p277 = scmp.lt.s32.totalorder %s42, 13
    %p278 = pnand %p276, %p277
    %p279 = pneg %p278
    // Predicated region
    $region29: #{sparse_tubes_tokenizer.1} parent=5 // pred_check
      _
    $region30: #{sparse_tubes_tokenizer.1} parent=5 // pred_check_branch
      %281 = sbr.rel (%p278) target = $region32
    $region31: #{sparse_tubes_tokenizer.1} parent=5 // pred_region
      %s282 = ssub.s32 %s42, 1
      %s283 = sld [smem:[#allocation7 + %s52]]
      %s284 = ssub.s32 %s283, 1
      %p285 = scmp.lt.s32.totalorder %s54, %s284
      %s286 = scalar_select %p285, %s54, %s284
      %s287 = sld [smem:[#allocation5 + %s52]]
      %s288 = sld [smem:[#allocation6 + %s52]]
      %s289 = smul.u32 %s286, %s288
      %s290 = sadd.s32 %s287, %s289
      %s291 = smul.u32 4, %s290
      %p292 = scmp.lt.s32.totalorder %s53, 1
      %s293 = scalar_select %p292, %s53, 1
      %p294 = scmp.lt.s32.totalorder %s291, 15
      %s295 = scalar_select %p294, %s291, 15
      %s296 = smul.addr %s295, 2
      %s297 = smul.addr %s293, 32
      %s298 = sadd.s32 %s296, %s297
      %s299 = smul.addr %s298, 4
      %s300 = scalar_lea.vmem %s5, %s299
      %p301 = pneg %p105
      %p302 = pneg %p102
      %s303 = sld [smem:[#allocation8 + %s52]]
      %s304 = sld [smem:[#allocation7 + %s52]]
      %s305 = ssub.s32 %s304, 1
      %p306 = scmp.lt.s32.totalorder %s54, %s305
      %s307 = scalar_select %p306, %s54, %s305
      %s308 = sadd.s32 %s303, %s307
      %p309 = scmp.lt.s32.totalorder %s308, 3
      %s310 = scalar_select %p309, %s308, 3
      %s311 = smul.addr %s310, 32
      %s312 = smul.addr %s311, 4
      %s313 = scalar_lea.vmem %s6, %s312
      %p314 = pneg %p143
      %p315 = pneg %p140
      %s316 = sld [smem:[#allocation4 + %s52]]
      %p317 = scmp.lt.s32.totalorder %s316, 1
      %s318 = scalar_select %p317, %s316, 1
      %s319 = scalar_lea.vmem %s7, %s318
      %p320 = pneg %p171
      %p321 = pneg %p168
      %p322 = pneg %p199
      %p323 = pneg %p196
      %s324 = smul.u32 4, %s52
      %p325 = scmp.lt.s32.totalorder %s53, 1
      %s326 = scalar_select %p325, %s53, 1
      %p327 = scmp.lt.s32.totalorder %s324, 7
      %s328 = scalar_select %p327, %s324, 7
      %s329 = smul.addr %s326, 8
      %s330 = sadd.s32 %s328, %s329
      %s331 = smul.addr %s330, 8
      %s332 = scalar_lea.vmem %s8, %s331
      %s333 = sld [smem:[#allocation7 + %s52]]
      %s334 = ssub.s32 %s333, 1
      %p335 = scmp.lt.s32.totalorder %s54, %s334
      %s336 = scalar_select %p335, %s54, %s334
      %s337 = sld [smem:[#allocation5 + %s52]]
      %s338 = sld [smem:[#allocation6 + %s52]]
      %s339 = smul.u32 %s336, %s338
      %s340 = sadd.s32 %s337, %s339
      %s341 = smul.u32 4, %s340
      %p342 = scmp.lt.s32.totalorder %s53, 1
      %s343 = scalar_select %p342, %s53, 1
      %p344 = scmp.lt.s32.totalorder %s341, 15
      %s345 = scalar_select %p344, %s341, 15
      %s346 = smul.addr %s345, 2
      %s347 = smul.addr %s343, 32
      %s348 = sadd.s32 %s346, %s347
      %s349 = smul.addr %s348, 4
      %s350 = scalar_lea.vmem %s5, %s349
      %s351 = sld [smem:[#allocation7 + %s52]]
      %s352 = ssub.s32 %s351, 1
      %p353 = scmp.lt.s32.totalorder %s54, %s352
      %s354 = scalar_select %p353, %s54, %s352
      %s355 = sld [smem:[#allocation5 + %s52]]
      %s356 = sld [smem:[#allocation6 + %s52]]
      %s357 = smul.u32 %s354, %s356
      %s358 = sadd.s32 %s355, %s357
      %s359 = smul.u32 4, %s358
      %s360 = sld [smem:[#allocation8 + %s52]]
      %s361 = sld [smem:[#allocation7 + %s52]]
      %s362 = ssub.s32 %s361, 1
      %p363 = scmp.lt.s32.totalorder %s54, %s362
      %s364 = scalar_select %p363, %s54, %s362
      %s365 = sadd.s32 %s360, %s364
      %p366 = scmp.lt.s32.totalorder %s365, 3
      %s367 = scalar_select %p366, %s365, 3
      %s368 = smul.addr %s367, 32
      %s369 = smul.addr %s368, 4
      %s370 = scalar_lea.vmem %s6, %s369
      %s371 = sld [smem:[#allocation8 + %s52]]
      %s372 = sld [smem:[#allocation7 + %s52]]
      %s373 = ssub.s32 %s372, 1
      %p374 = scmp.lt.s32.totalorder %s54, %s373
      %s375 = scalar_select %p374, %s54, %s373
      %s376 = sadd.s32 %s371, %s375
      %s377 = sld [smem:[#allocation4 + %s52]]
      %p378 = scmp.lt.s32.totalorder %s377, 1
      %s379 = scalar_select %p378, %s377, 1
      %s380 = scalar_lea.vmem %s7, %s379
      %s381 = sld [smem:[#allocation4 + %s52]]
      %s382 = smul.u32 4, %s52
      %p383 = scmp.lt.s32.totalorder %s53, 1
      %s384 = scalar_select %p383, %s53, 1
      %p385 = scmp.lt.s32.totalorder %s382, 7
      %s386 = scalar_select %p385, %s382, 7
      %s387 = smul.addr %s384, 8
      %s388 = sadd.s32 %s386, %s387
      %s389 = smul.addr %s388, 8
      %s390 = scalar_lea.vmem %s8, %s389
      %s391 = smul.u32 4, %s52
      %p392 = scmp.eq.s32.totalorder %s54, 0
      // Predicated region
      $region33: #{sparse_tubes_tokenizer.1} parent=31 // pred_check
        %p393 = pneg %p392
      $region34: #{sparse_tubes_tokenizer.1} parent=31 // pred_check_branch
        %395 = sbr.rel (%p393) target = $region36
      $region35: #{sparse_tubes_tokenizer.1} parent=31 // pred_region
        %396 = vst [vmem:[#allocation2] sm:$0xff] 0.0
        %397 = vst [vmem:[#allocation2 + $0x8] sm:$0xff] 0.0
        %398 = vst [vmem:[#allocation2 + $0x10] sm:$0xff] 0.0
        %399 = vst [vmem:[#allocation2 + $0x18] sm:$0xff] 0.0
      $region36: #{sparse_tubes_tokenizer.1} parent=31 // pred_fallthru
        _
      %s400 = sld [smem:[#allocation7 + %s52]]
      %p401 = scmp.lt.s32.totalorder %s54, %s400
      // Predicated region
      $region37: #{sparse_tubes_tokenizer.1} parent=31 // pred_check
        %p402 = pneg %p401
      $region38: #{sparse_tubes_tokenizer.1} parent=31 // pred_check_branch
        %404 = sbr.rel (%p402) target = $region40
      $region39: #{sparse_tubes_tokenizer.1} parent=31 // pred_region
        %v405 = vld [vmem:[#allocation2] sm:$0xff]
        %v406 = vld [vmem:[#allocation2 + $0x8] sm:$0xff]
        %v407 = vld [vmem:[#allocation2 + $0x10] sm:$0xff]
        %v408 = vld [vmem:[#allocation2 + $0x18] sm:$0xff]
        %v409 = vld [vmem:[%s350] sm:$0xff]
        %v410 = vld [vmem:[%s350 + $0x8] sm:$0xff]
        %v411 = vld [vmem:[%s350 + $0x10] sm:$0xff]
        %v412 = vld [vmem:[%s350 + $0x18] sm:$0xff]
        %v413 = vld [vmem:[%s370] sm:$0xf]
        %v414 = vld [vmem:[%s370 + $0x4] sm:$0xf]
        %v415 = vld [vmem:[%s370 + $0x8] sm:$0xf]
        %v416 = vld [vmem:[%s370 + $0xc] sm:$0xf]
        %v417 = vld [vmem:[%s370 + $0x10] sm:$0xf]
        %v418 = vld [vmem:[%s370 + $0x14] sm:$0xf]
        %v419 = vld [vmem:[%s370 + $0x18] sm:$0xf]
        %v420 = vld [vmem:[%s370 + $0x1c] sm:$0xf]
        %v421 = vld [vmem:[%s370 + $0x20] sm:$0xf]
        %v422 = vld [vmem:[%s370 + $0x24] sm:$0xf]
        %v423 = vld [vmem:[%s370 + $0x28] sm:$0xf]
        %v424 = vld [vmem:[%s370 + $0x2c] sm:$0xf]
        %v425 = vld [vmem:[%s370 + $0x30] sm:$0xf]
        %v426 = vld [vmem:[%s370 + $0x34] sm:$0xf]
        %v427 = vld [vmem:[%s370 + $0x38] sm:$0xf]
        %v428 = vld [vmem:[%s370 + $0x3c] sm:$0xf]
        %v429 = vld [vmem:[%s370 + $0x40] sm:$0xf]
        %v430 = vld [vmem:[%s370 + $0x44] sm:$0xf]
        %v431 = vld [vmem:[%s370 + $0x48] sm:$0xf]
        %v432 = vld [vmem:[%s370 + $0x4c] sm:$0xf]
        %v433 = vld [vmem:[%s370 + $0x50] sm:$0xf]
        %v434 = vld [vmem:[%s370 + $0x54] sm:$0xf]
        %v435 = vld [vmem:[%s370 + $0x58] sm:$0xf]
        %v436 = vld [vmem:[%s370 + $0x5c] sm:$0xf]
        %v437 = vld [vmem:[%s370 + $0x60] sm:$0xf]
        %v438 = vld [vmem:[%s370 + $0x64] sm:$0xf]
        %v439 = vld [vmem:[%s370 + $0x68] sm:$0xf]
        %v440 = vld [vmem:[%s370 + $0x6c] sm:$0xf]
        %v441 = vld [vmem:[%s370 + $0x70] sm:$0xf]
        %v442 = vld [vmem:[%s370 + $0x74] sm:$0xf]
        %v443 = vld [vmem:[%s370 + $0x78] sm:$0xf]
        %v444 = vld [vmem:[%s370 + $0x7c] sm:$0xf]
        %v449 = vunpack.c.l.b16 %v409
        %v450 = vunpack.c.h.b16 %v409
        %v451 = vunpack.c.l.b16 %v410
        %v452 = vunpack.c.h.b16 %v410
        %v453 = vunpack.c.l.b16 %v411
        %v454 = vunpack.c.h.b16 %v411
        %v455 = vunpack.c.l.b16 %v412
        %v456 = vunpack.c.h.b16 %v412
        %v457 = vpack.c.b16 %v451, %v449
        %v458 = vpack.c.b16 %v452, %v450
        %v459 = vpack.c.b16 %v455, %v453
        %v460 = vpack.c.b16 %v456, %v454
        %v497 = vunpack.c.l.b16 %v413
        %v498 = vunpack.c.l.b16 %v414
        %v499 = vunpack.c.l.b16 %v415
        %v500 = vunpack.c.l.b16 %v416
        %v501 = vunpack.c.l.b16 %v417
        %v502 = vunpack.c.l.b16 %v418
        %v503 = vunpack.c.l.b16 %v419
        %v504 = vunpack.c.l.b16 %v420
        %v505 = vunpack.c.l.b16 %v421
        %v506 = vunpack.c.l.b16 %v422
        %v507 = vunpack.c.l.b16 %v423
        %v508 = vunpack.c.l.b16 %v424
        %v509 = vunpack.c.l.b16 %v425
        %v510 = vunpack.c.l.b16 %v426
        %v511 = vunpack.c.l.b16 %v427
        %v512 = vunpack.c.l.b16 %v428
        %v513 = vunpack.c.l.b16 %v429
        %v514 = vunpack.c.l.b16 %v430
        %v515 = vunpack.c.l.b16 %v431
        %v516 = vunpack.c.l.b16 %v432
        %v517 = vunpack.c.l.b16 %v433
        %v518 = vunpack.c.l.b16 %v434
        %v519 = vunpack.c.l.b16 %v435
        %v520 = vunpack.c.l.b16 %v436
        %v521 = vunpack.c.l.b16 %v437
        %v522 = vunpack.c.l.b16 %v438
        %v523 = vunpack.c.l.b16 %v439
        %v524 = vunpack.c.l.b16 %v440
        %v525 = vunpack.c.l.b16 %v441
        %v526 = vunpack.c.l.b16 %v442
        %v527 = vunpack.c.l.b16 %v443
        %v528 = vunpack.c.l.b16 %v444
        %v529 = vpack.c.b16 %v498, %v497
        %v530 = vpack.c.b16 %v500, %v499
        %v531 = vpack.c.b16 %v502, %v501
        %v532 = vpack.c.b16 %v504, %v503
        %v533 = vpack.c.b16 %v506, %v505
        %v534 = vpack.c.b16 %v508, %v507
        %v535 = vpack.c.b16 %v510, %v509
        %v536 = vpack.c.b16 %v512, %v511
        %v537 = vpack.c.b16 %v514, %v513
        %v538 = vpack.c.b16 %v516, %v515
        %v539 = vpack.c.b16 %v518, %v517
        %v540 = vpack.c.b16 %v520, %v519
        %v541 = vpack.c.b16 %v522, %v521
        %v542 = vpack.c.b16 %v524, %v523
        %v543 = vpack.c.b16 %v526, %v525
        %v544 = vpack.c.b16 %v528, %v527
        %561 = vmatpush.bf16.msra.mxu0 %v536
        %562 = vmatpush.bf16.msra.mxu0 %v535
        %563 = vmatpush.bf16.msra.mxu0 %v534
        %564 = vmatpush.bf16.msra.mxu0 %v533
        %565 = vmatpush.bf16.msra.mxu0 %v532
        %566 = vmatpush.bf16.msra.mxu0 %v531
        %567 = vmatpush.bf16.msra.mxu0 %v530
        %568 = vmatpush.bf16.msra.mxu0 %v529
        %569 = vmatmul.bf16.gmra.mxu0 %v457
        %v570 = vpop.f32.mrf.mxu0
        %v571 = vadd.f32 0.0, %v570
        %v572 = vpop.f32.mrf.mxu0
        %v573 = vadd.f32 0.0, %v572
        %574 = vmatmul.bf16.gmra.mxu0 %v459
        %v575 = vpop.f32.mrf.mxu0
        %v576 = vadd.f32 0.0, %v575
        %v577 = vpop.f32.mrf.mxu0
        %v578 = vadd.f32 0.0, %v577
        %579 = vdwg.mxu0
        %580 = vmatpush.bf16.msra.mxu0 %v544
        %581 = vmatpush.bf16.msra.mxu0 %v543
        %582 = vmatpush.bf16.msra.mxu0 %v542
        %583 = vmatpush.bf16.msra.mxu0 %v541
        %584 = vmatpush.bf16.msra.mxu0 %v540
        %585 = vmatpush.bf16.msra.mxu0 %v539
        %586 = vmatpush.bf16.msra.mxu0 %v538
        %587 = vmatpush.bf16.msra.mxu0 %v537
        %588 = vmatmul.bf16.gmra.mxu0 %v458
        %v589 = vpop.f32.mrf.mxu0
        %v590 = vadd.f32 %v571, %v589
        %v591 = vpop.f32.mrf.mxu0
        %v592 = vadd.f32 %v573, %v591
        %593 = vmatmul.bf16.gmra.mxu0 %v460
        %v594 = vpop.f32.mrf.mxu0
        %v595 = vadd.f32 %v576, %v594
        %v596 = vpop.f32.mrf.mxu0
        %v597 = vadd.f32 %v578, %v596
        %598 = vdwg.mxu0
        %v599 = vadd.f32 %v405, %v590
        %v600 = vadd.f32 %v406, %v592
        %v601 = vadd.f32 %v407, %v595
        %v602 = vadd.f32 %v408, %v597
        %603 = vst [vmem:[#allocation2] sm:$0xff] %v599
        %604 = vst [vmem:[#allocation2 + $0x8] sm:$0xff] %v600
        %605 = vst [vmem:[#allocation2 + $0x10] sm:$0xff] %v601
        %606 = vst [vmem:[#allocation2 + $0x18] sm:$0xff] %v602
      $region40: #{sparse_tubes_tokenizer.1} parent=31 // pred_fallthru
        _
      %p607 = scmp.eq.s32.totalorder %s54, 2
      // Predicated region
      $region41: #{sparse_tubes_tokenizer.1} parent=31 // pred_check
        %p608 = pneg %p607
      $region42: #{sparse_tubes_tokenizer.1} parent=31 // pred_check_branch
        %610 = sbr.rel (%p608) target = $region44
      $region43: #{sparse_tubes_tokenizer.1} parent=31 // pred_region
        %v611 = vld [vmem:[#allocation2] sm:$0xff]
        %v612 = vld [vmem:[#allocation2 + $0x8] sm:$0xff]
        %v613 = vld [vmem:[#allocation2 + $0x10] sm:$0xff]
        %v614 = vld [vmem:[#allocation2 + $0x18] sm:$0xff]
        %v615 = vld [vmem:[%s380] sm:$0x1]
        %v617 = vperm.slane %v615, 0
        %v619 = vadd.f32 %v611, %v617
        %v620 = vadd.f32 %v612, %v617
        %v621 = vadd.f32 %v613, %v617
        %v622 = vadd.f32 %v614, %v617
        %623 = vst [vmem:[%s390] sm:$0xff] %v619
        %624 = vst [vmem:[%s390 + $0x8] sm:$0xff] %v620
        %625 = vst [vmem:[%s390 + $0x10] sm:$0xff] %v621
        %626 = vst [vmem:[%s390 + $0x18] sm:$0xff] %v622
      $region44: #{sparse_tubes_tokenizer.1} parent=31 // pred_fallthru
        _
      %s627 = smul.u32 4, %s52
      %p628 = scmp.lt.s32.totalorder %s53, 1
      %s629 = scalar_select %p628, %s53, 1
      %p630 = scmp.lt.s32.totalorder %s627, 7
      %s631 = scalar_select %p630, %s627, 7
      %s632 = smul.addr %s629, 8
      %s633 = sadd.s32 %s631, %s632
      %s634 = smul.addr %s633, 8
      %s635 = scalar_lea.vmem %s8, %s634
      // Predicated region
      $region45: #{sparse_tubes_tokenizer.1} parent=31 // pred_check
        %p636 = pneg %p196
      $region46: #{sparse_tubes_tokenizer.1} parent=31 // pred_check_branch
        %638 = sbr.rel (%p636) target = $region48
      $region47: #{sparse_tubes_tokenizer.1} parent=31 // pred_region
        %s639 = smul.u32 4, %s52
      $region48: #{sparse_tubes_tokenizer.1} parent=31 // pred_fallthru
        _
    $region32: #{sparse_tubes_tokenizer.1} parent=5 // pred_fallthru
      _
    %p640 = scmp.le.s32.totalorder 2, %s42
    // Predicated region
    $region49: #{sparse_tubes_tokenizer.1} parent=5 // pred_check
      %p641 = pneg %p640
    $region50: #{sparse_tubes_tokenizer.1} parent=5 // pred_check_branch
      %643 = sbr.rel (%p641) target = $region52
    $region51: #{sparse_tubes_tokenizer.1} parent=5 // pred_region
      %s644 = ssub.s32 %s42, 2
      // Predicated region
      $region53: #{sparse_tubes_tokenizer.1} parent=51 // pred_check
        %p645 = pneg %p202
      $region54: #{sparse_tubes_tokenizer.1} parent=51 // pred_check_branch
        %647 = sbr.rel (%p645) target = $region56
      $region55: #{sparse_tubes_tokenizer.1} parent=51 // pred_region
        %s648 = smul.u32 4, %s55
        %p649 = scmp.lt.s32.totalorder %s56, 1
        %s650 = scalar_select %p649, %s56, 1
        %p651 = scmp.lt.s32.totalorder %s648, 7
        %s652 = scalar_select %p651, %s648, 7
        %s653 = smul.addr %s650, 8
        %s654 = sadd.s32 %s652, %s653
        %s655 = smul.addr %s654, 8
        %s656 = scalar_lea.vmem %s8, %s655
      $region56: #{sparse_tubes_tokenizer.1} parent=51 // pred_fallthru
        _
    $region52: #{sparse_tubes_tokenizer.1} parent=5 // pred_fallthru
      _
  $region6: #{sparse_tubes_tokenizer.1} parent=0 // loop_footer
    %s46 = sadd.s32 1, %s42
  $region7: #{sparse_tubes_tokenizer.1} parent=0 // loop_footer_branch
    %41 = sbr.rel target = $region3
  $region8: #{sparse_tubes_tokenizer.1} parent=0 // loop_exit
    _

</llo_original>
